<compile_context>
chip_gen: v6e
topology: v6e:2x2x1
jax: 0.10.0
libtpu: 0.0.40
codegen_flags: <defaults>
</compile_context>

<pallas_src>
import jax
import jax.numpy as jnp
from jax.experimental import pallas as pl
from jax.experimental.pallas import tpu as pltpu


def _sigmoid_kernel(x_ref, o_ref):
    x = x_ref[...]
    # bf16 stays native (v6e/v7x have bf16 VPU/EUP; v5e compiler promotes
    # internally); anything narrower than bf16 is upcast to f32 for safety.
    if x.dtype != jnp.float32 and x.dtype != jnp.bfloat16:
        x = x.astype(jnp.float32)
    # Single-transcendental sigmoid: one EUP push per element.
    y = jnp.tanh(x * 0.5) * 0.5 + 0.5
    o_ref[...] = y.astype(o_ref.dtype)


def sigmoid_pallas(x: jax.Array) -> jax.Array:
    """Elementwise sigmoid via a Pallas TPU kernel (any shape, float dtype)."""
    orig_shape = x.shape
    dtype = x.dtype
    n = x.size
    if n == 0:
        return x
    itemsize = jnp.dtype(dtype).itemsize

    # Widest lane-dense layout that divides the element count -> free reshape.
    lanes = None
    for cand in (1024, 512, 256, 128):
        if n % cand == 0:
            lanes = cand
            break

    flat = jnp.ravel(x)
    padded = False
    if lanes is None:
        # Ragged tail: pad once to a 128-lane multiple. Only path that
        # materializes a copy; typical NCHW feature maps never hit it.
        lanes = 128
        pad = (-n) % lanes
        flat = jnp.pad(flat, (0, pad))
        padded = True

    rows = flat.size // lanes
    x2d = flat.reshape(rows, lanes)

    # ~8 MiB blocks: double-buffered in+out => ~32 MiB live VMEM, safe on all
    # generations with the 48 MiB limit below, and per-step overhead stays a
    # small fraction of the DMA time even at v7x HBM rates.
    target_block_bytes = 8 * 1024 * 1024
    # Sublane packing granularity per dtype (rows per packed vreg group).
    sublane = {4: 8, 2: 16, 1: 32}.get(itemsize, 8)

    rows_per_block = max(1, target_block_bytes // (lanes * itemsize))
    rows_per_block = max(sublane, (rows_per_block // sublane) * sublane)

    # Guarantee >= 2 grid programs for anything bigger than ~1 MiB so the
    # "parallel" axis can shard across v7x's 2 TensorCores.
    total_bytes = n * itemsize
    if total_bytes > (1 << 20) and rows >= 2 * sublane:
        cap = max(sublane, (rows // 2 // sublane) * sublane)
        rows_per_block = min(rows_per_block, cap)

    # If one block covers everything, use the full row extent (block shape
    # equal to the array dim is always layout-legal); otherwise the tile is a
    # sublane multiple and < rows, satisfying the (8,128) divisibility rule.
    tile_rows = rows if rows_per_block >= rows else rows_per_block

    grid = (pl.cdiv(rows, tile_rows),)

    cost = pl.CostEstimate(
        flops=4 * n,
        transcendentals=n,
        bytes_accessed=2 * n * itemsize,
    )

    out2d = pl.pallas_call(
        _sigmoid_kernel,
        out_shape=jax.ShapeDtypeStruct((rows, lanes), dtype),
        grid_spec=pltpu.PrefetchScalarGridSpec(
            num_scalar_prefetch=0,
            grid=grid,
            in_specs=[pl.BlockSpec((tile_rows, lanes), lambda i: (i, 0))],
            out_specs=pl.BlockSpec((tile_rows, lanes), lambda i: (i, 0)),
        ),
        compiler_params=pltpu.CompilerParams(
            # 1-D independent axis: lets the runtime shard grid steps across
            # TensorCores on multi-TC parts (v7x).
            dimension_semantics=("parallel",),
            vmem_limit_bytes=48 * 1024 * 1024,
        ),
        cost_estimate=cost,
    )(x2d)

    out_flat = out2d.reshape(-1)
    if padded:
        out_flat = out_flat[:n]
    return out_flat.reshape(orig_shape)


if __name__ == "__main__":
    key = jax.random.PRNGKey(0)
    # NCHW input, small shape consistent with a conv-style feature map.
    x = jax.random.normal(key, (2, 4, 16, 16), dtype=jnp.float32)

    y = sigmoid_pallas(x)
    y = jax.block_until_ready(y)

    # sanity check against plain JAX
    y_ref = jax.nn.sigmoid(x)
    assert y.shape == x.shape and y.dtype == x.dtype
    assert jnp.max(jnp.abs(y - y_ref)) < 1e-5

    print("KERNEL_OK")
</pallas_src>

<mosaic_0001>
module attributes {stable_mosaic.version = 11 : i64} {
  func.func @_sigmoid_kernel(%arg0: i32, %arg1: memref<2x1024xf32, #tpu.memory_space<vmem>>, %arg2: memref<2x1024xf32, #tpu.memory_space<vmem>>) attributes {dimension_semantics = [#tpu.dimension_semantics<parallel>], iteration_bounds = array<i64: 1>, scalar_prefetch = 0 : i64, scratch_operands = 0 : i64, tpu.core_type = #tpu.core_type<tc>, window_params = [{transform_indices = @transform_0, window_bounds = array<i64: 2, 1024>}, {transform_indices = @transform_1, window_bounds = array<i64: 2, 1024>}]} {
    %c0 = arith.constant 0 : index
    %c0_0 = arith.constant 0 : index
    %0 = vector.load %arg1[%c0, %c0_0] : memref<2x1024xf32, #tpu.memory_space<vmem>>, vector<2x1024xf32>
    %cst = arith.constant 5.000000e-01 : f32
    %1 = vector.broadcast %cst : f32 to vector<2x1024xf32>
    %2 = arith.mulf %0, %1 : vector<2x1024xf32>
    %3 = math.tanh %2 : vector<2x1024xf32>
    %cst_1 = arith.constant 5.000000e-01 : f32
    %4 = vector.broadcast %cst_1 : f32 to vector<2x1024xf32>
    %5 = arith.mulf %3, %4 : vector<2x1024xf32>
    %cst_2 = arith.constant 5.000000e-01 : f32
    %6 = vector.broadcast %cst_2 : f32 to vector<2x1024xf32>
    %7 = arith.addf %5, %6 : vector<2x1024xf32>
    %c0_3 = arith.constant 0 : index
    %c0_4 = arith.constant 0 : index
    %8 = vector.load %arg2[%c0_3, %c0_4] : memref<2x1024xf32, #tpu.memory_space<vmem>>, vector<2x1024xf32>
    tpu.vector_store %arg2[%c0_3, %c0_4], %7 {strides = array<i32>} : memref<2x1024xf32, #tpu.memory_space<vmem>>, vector<2x1024xf32>,
    return
  }
  func.func @transform_0(%arg0: i32) -> (i32, i32) {
    %c0_i32 = arith.constant 0 : i32
    %c0_i32_0 = arith.constant 0 : i32
    return %arg0, %c0_i32 : i32, i32
  }
  func.func @transform_1(%arg0: i32) -> (i32, i32) {
    %c0_i32 = arith.constant 0 : i32
    %c0_i32_0 = arith.constant 0 : i32
    return %arg0, %c0_i32 : i32, i32
  }
}

</mosaic_0001>

<llo_original>
// kernel: tpu_custom_call.1
$region0: #{tpu_custom_call.1}
  #allocation0 [shape = 'u32[]', space=smem, size = 0x4, offset = 0x4, fixed_abs, tag = 'smem constant byte address 0x4 - core index']
  #allocation1 [shape = 'u32[144,128]{1,0:T(1,128)}', space=vmem, size = 0x12000, scoped, tag = 'internal scratch']
  %s0 = inlined_call_operand.hbm [shape: f32[2,1024], index: 0, kind: input, shape index: {}]
  %s1 = inlined_call_operand.hbm [shape: f32[2,1024], index: 1, kind: output, shape index: {}]
  %s2 = sld [smem:[#allocation0]]
  $region18: #{tpu_custom_call.1} parent=0
    _
  %s4 = ssub.s32 1, %s2
  %s5 = scalar_select 0, %s4, %s2
  $region1: #{tpu_custom_call.1} parent=0
    #allocation2 [shape = 'u8[8192]{0}', space=vmem, size = 0x2000, scoped, tag = 'input window, operand 0, single buffered']
    #allocation3 [shape = 's32[1]{0}', space=sflag, size = 0x4, scoped, tag = 'scoped memory for tpu_custom_call.1']
    #allocation4 [shape = 's32[1]{0}', space=sflag, size = 0x4, scoped, tag = 'scoped memory for tpu_custom_call.1']
    #allocation5 [shape = 'u8[8192]{0}', space=vmem, size = 0x2000, scoped, tag = 'output window, operand 0, single buffered']
    %6 = vsyncpa [#allocation3], 0
    %7 = vsyncpa [#allocation4], 0
    // Predicated region
    $region2: #{tpu_custom_call.1} parent=1 // pred_check
      _
    $region3: #{tpu_custom_call.1} parent=1 // pred_check_branch
      %9 = sbr.rel (0) target = $region5
    $region4: #{tpu_custom_call.1} parent=1 // pred_region
      %s11 = ssub.s32 256, 256
      %12 = vsyncadd [#allocation3], %s11
      %s14 = sshll.u32 [#allocation2], 4
      %s15 = int_to_ptr.vmem [resolvable:$true] %s14
      %17 = dma.hbm_to_vmem [thread:$0]  %s0, 256, %s15, [#allocation3]
    $region5: #{tpu_custom_call.1} parent=1 // pred_fallthru
      _
    // Predicated region
    $region6: #{tpu_custom_call.1} parent=1 // pred_check
      _
    $region7: #{tpu_custom_call.1} parent=1 // pred_check_branch
      %19 = sbr.rel (0) target = $region9
    $region8: #{tpu_custom_call.1} parent=1 // pred_region
      %20 = dma.done [#allocation3], 256
    $region9: #{tpu_custom_call.1} parent=1 // pred_fallthru
      _
    %v21 = vld [vmem:[#allocation2] sm:$0xff]
    %v22 = vld [vmem:[#allocation2 + $0x8] sm:$0xff]
    %v23 = vmul.f32 %v21, 0.5
    %v24 = vmul.f32 %v22, 0.5
    %v25 = vtanh.pop %v23
    %v26 = vtanh.pop %v24
    %v27 = vmul.f32 %v25, 0.5
    %v28 = vmul.f32 %v26, 0.5
    %v29 = vadd.f32 %v27, 0.5
    %v30 = vadd.f32 %v28, 0.5
    %31 = vst [vmem:[#allocation5] sm:$0xff] %v29
    %32 = vst [vmem:[#allocation5 + $0x8] sm:$0xff] %v30
    // Predicated region
    $region10: #{tpu_custom_call.1} parent=1 // pred_check
      _
    $region11: #{tpu_custom_call.1} parent=1 // pred_check_branch
      %34 = sbr.rel (0) target = $region13
    $region12: #{tpu_custom_call.1} parent=1 // pred_region
      %s36 = ssub.s32 256, 256
      %37 = vsyncadd [#allocation4], %s36
      %s39 = sshll.u32 [#allocation5], 4
      %s40 = int_to_ptr.vmem [resolvable:$true] %s39
      %42 = dma.vmem_to_hbm [thread:$0]  %s40, 256, %s1, [#allocation4]
    $region13: #{tpu_custom_call.1} parent=1 // pred_fallthru
      _
    // Predicated region
    $region14: #{tpu_custom_call.1} parent=1 // pred_check
      _
    $region15: #{tpu_custom_call.1} parent=1 // pred_check_branch
      %44 = sbr.rel (0) target = $region17
    $region16: #{tpu_custom_call.1} parent=1 // pred_region
      %45 = dma.done [#allocation4], 256
    $region17: #{tpu_custom_call.1} parent=1 // pred_fallthru
      _
    %46 = vsyncpa [#allocation3], 1
    %47 = vsyncpa [#allocation4], 1

</llo_original>
